<compile_context>
chip_gen: v5e
topology: v5e:2x2
jax: 0.10.0
libtpu: 0.0.40
codegen_flags: <defaults>
</compile_context>

<pallas_src>
import math

import jax
import jax.numpy as jnp
from jax.experimental import pallas as pl
from jax.experimental.pallas import tpu as pltpu


def _round_up(x: int, m: int) -> int:
    return ((x + m - 1) // m) * m


def _make_kernel(v_total: int, tv: int, resident_w: bool, has_tail: bool):
    def kernel(x_ref, w_ref, o_ref, acc_ref):
        # x_ref:   (tm, tv)        logits tile (lane axis = vocab chunk)
        # w_ref:   (8, Vp)|(8, tv) weight block; row 0 real, rows 1..7 zero
        # o_ref:   (tm, 1)         output tile, resident across the vocab axis
        # acc_ref: (tm, 8)         f32 accumulator scratch
        k = pl.program_id(1)

        @pl.when(k == 0)
        def _():
            acc_ref[...] = jnp.zeros_like(acc_ref)

        x = x_ref[...]
        if has_tail:
            # OOB lanes of the last vocab edge block are undefined on read;
            # zero them so garbage (possibly NaN/Inf) cannot poison valid rows
            # via 0 * NaN.  `valid >= tv` on all earlier blocks (no-op select).
            valid = v_total - k * tv
            lane = jax.lax.broadcasted_iota(jnp.int32, x.shape, 1)
            x = jnp.where(lane < valid, x, jnp.zeros_like(x))

        if resident_w:
            # Whole padded weight row-block lives in VMEM; take this step's
            # 128-aligned vocab slice (zero HBM re-fetch per k step).
            w = w_ref[:, pl.ds(pl.multiple_of(k * tv, 128), tv)]
        else:
            w = w_ref[...]

        # Contract the vocab (lane) axis of both operands: (tm, tv) x (8, tv)^T.
        acc_ref[...] += jax.lax.dot_general(
            x, w,
            dimension_numbers=(((1,), (1,)), ((), ())),
            preferred_element_type=jnp.float32,
        )

        @pl.when(k == pl.num_programs(1) - 1)
        def _():
            # Only column 0 of the accumulator is meaningful (weight rows 1..7
            # are zero padding).
            o_ref[...] = acc_ref[:, 0:1].astype(o_ref.dtype)

    return kernel


def logits_calibrator(logits: jax.Array, weight: jax.Array, *, tm: int = 1024,
                      tv_max: int = 8192) -> jax.Array:
    """Apply the calibrator: (..., V) @ weight.T -> (..., 1).

    weight has shape (1, V), mirroring nn.Linear(V, 1, bias=False).weight.
    The weight is used in the logits dtype (the module itself is bf16).
    """
    *lead, V = logits.shape
    M = math.prod(lead) if lead else 1
    dtype = logits.dtype
    itemsize = jnp.dtype(dtype).itemsize

    x2d = logits.reshape(M, V)
    w_row = weight.reshape(1, V).astype(dtype)

    # ---- vocab tiling (cdiv-based; no padding of the big logits array) -----
    tv_max = max(128, (tv_max // 128) * 128)
    v128 = _round_up(V, 128)
    k_steps = pl.cdiv(v128, tv_max)
    tv = _round_up(pl.cdiv(v128, k_steps), 128)
    Vp = tv * k_steps
    has_tail = (Vp != V)

    # ---- M tiling: dtype-aware sublane packing + >=2 blocks for megacore ---
    row_align = max(8, 32 // itemsize)          # 8 f32 / 16 bf16 / 32 int8
    tm = max(row_align, (tm // row_align) * row_align)
    tm_eff = min(tm, _round_up(pl.cdiv(M, 2), row_align))
    grid = (pl.cdiv(M, tm_eff), k_steps)

    # ---- weight: tiny zero-padded (8, Vp) block; resident when it fits ------
    resident_w = (16 * Vp * itemsize) <= (8 << 20)   # ~2x buffers <= 8 MiB
    w_blk = jnp.pad(w_row, ((0, 7), (0, Vp - V)))    # tiny pad only (weight)
    if resident_w:
        w_spec = pl.BlockSpec((8, Vp), lambda i, k: (0, 0))
    else:
        w_spec = pl.BlockSpec((8, tv), lambda i, k: (0, k))

    # ---- VMEM budget: actual tile footprint, floor 32 MiB, cap 64 MiB -------
    buf_bytes = 2 * tm_eff * tv * itemsize                       # x double-buffer
    buf_bytes += 2 * 8 * (Vp if resident_w else tv) * itemsize   # weight
    buf_bytes += tm_eff * 8 * 4 + 2 * tm_eff * itemsize          # acc + out
    vmem_limit = int(min(64 << 20,
                         max(32 << 20, buf_bytes + buf_bytes // 4 + (2 << 20))))

    cost = pl.CostEstimate(
        flops=2 * M * Vp * 8,
        transcendentals=0,
        bytes_accessed=(M * V + 8 * Vp + M) * itemsize,
    )

    out2d = pl.pallas_call(
        _make_kernel(V, tv, resident_w, has_tail),
        out_shape=jax.ShapeDtypeStruct((M, 1), dtype),
        grid_spec=pltpu.PrefetchScalarGridSpec(
            num_scalar_prefetch=0,
            grid=grid,
            in_specs=[
                pl.BlockSpec((tm_eff, tv), lambda i, k: (i, k)),
                w_spec,
            ],
            out_specs=pl.BlockSpec((tm_eff, 1), lambda i, k: (i, 0)),
            scratch_shapes=[pltpu.VMEM((tm_eff, 8), jnp.float32)],
        ),
        compiler_params=pltpu.CompilerParams(
            dimension_semantics=("parallel", "arbitrary"),
            vmem_limit_bytes=vmem_limit,
        ),
        cost_estimate=cost,
    )(x2d, w_blk)

    return out2d.reshape(*lead, 1)


def _ref(logits, weight):
    return (logits.astype(jnp.float32)
            @ weight.reshape(1, -1).astype(jnp.float32).T)


if __name__ == "__main__":
    key = jax.random.PRNGKey(0)
    k_logits, k_w, k_logits2, k_w2 = jax.random.split(key, 4)
    dtype = jnp.bfloat16

    # ---- main check: batch=2, seq=8, vocab_size=256 (module-consistent) ----
    batch, seq, vocab_size = 2, 8, 256
    logits = jax.random.normal(k_logits, (batch, seq, vocab_size), dtype=dtype)
    bound = 1.0 / math.sqrt(vocab_size)
    weight = jax.random.uniform(
        k_w, (1, vocab_size), minval=-bound, maxval=bound, dtype=jnp.float32
    ).astype(dtype)   # nn.Linear default init, stored in bf16 like the module

    out = jax.block_until_ready(logits_calibrator(logits, weight))
    ref = _ref(logits.reshape(-1, vocab_size), weight).reshape(batch, seq, 1)
    assert out.shape == (batch, seq, 1), out.shape
    assert jnp.allclose(out.astype(jnp.float32), ref, atol=1e-2, rtol=1e-2)

    # ---- ragged vocab (V not a multiple of 128): exercises in-kernel mask ---
    v2 = 200
    logits2 = jax.random.normal(k_logits2, (2, 5, v2), dtype=dtype)
    bound2 = 1.0 / math.sqrt(v2)
    weight2 = jax.random.uniform(
        k_w2, (1, v2), minval=-bound2, maxval=bound2, dtype=jnp.float32
    ).astype(dtype)
    out2 = jax.block_until_ready(logits_calibrator(logits2, weight2))
    ref2 = _ref(logits2.reshape(-1, v2), weight2).reshape(2, 5, 1)
    assert out2.shape == (2, 5, 1)
    assert jnp.allclose(out2.astype(jnp.float32), ref2, atol=1e-2, rtol=1e-2)

    # ---- multi-step vocab reduction + resident-weight slicing + tail mask ---
    out3 = jax.block_until_ready(logits_calibrator(logits2, weight2, tv_max=128))
    assert jnp.allclose(out3.astype(jnp.float32), ref2, atol=1e-2, rtol=1e-2)

    print("KERNEL_OK")
</pallas_src>

<mosaic_0001>
module attributes {stable_mosaic.version = 11 : i64} {
  func.func @kernel(%arg0: i32, %arg1: i32, %arg2: memref<16x256xbf16, #tpu.memory_space<vmem>>, %arg3: memref<8x256xbf16, #tpu.memory_space<vmem>>, %arg4: memref<16x1xbf16, #tpu.memory_space<vmem>>, %arg5: memref<16x8xf32, #tpu.memory_space<vmem>>) attributes {dimension_semantics = [#tpu.dimension_semantics<parallel>, #tpu.dimension_semantics<arbitrary>], iteration_bounds = array<i64: 1, 1>, scalar_prefetch = 0 : i64, scratch_operands = 1 : i64, tpu.core_type = #tpu.core_type<tc>, window_params = [{transform_indices = @transform_0, window_bounds = array<i64: 16, 256>}, {pipeline_mode = #tpu.pipeline_mode<synchronous>, transform_indices = @transform_1, window_bounds = array<i64: 8, 256>}, {transform_indices = @transform_2, window_bounds = array<i64: 16, 1>}]} {
    %c0_i32 = arith.constant 0 : i32
    %0 = arith.cmpi eq, %arg1, %c0_i32 : i32
    %1 = arith.extui %0 : i1 to i32
    %c0_i32_0 = arith.constant 0 : i32
    %2 = arith.cmpi ne, %1, %c0_i32_0 : i32
    scf.if %2 {
      %cst_9 = arith.constant 0.000000e+00 : f32
      %15 = vector.broadcast %cst_9 : f32 to vector<16x8xf32>
      %c0_10 = arith.constant 0 : index
      %c0_11 = arith.constant 0 : index
      %16 = vector.load %arg5[%c0_10, %c0_11] : memref<16x8xf32, #tpu.memory_space<vmem>>, vector<16x8xf32>
      tpu.vector_store %arg5[%c0_10, %c0_11], %15 {strides = array<i32>} : memref<16x8xf32, #tpu.memory_space<vmem>>, vector<16x8xf32>,
    } else {
    }
    %c0 = arith.constant 0 : index
    %c0_1 = arith.constant 0 : index
    %3 = vector.load %arg2[%c0, %c0_1] : memref<16x256xbf16, #tpu.memory_space<vmem>>, vector<16x256xbf16>
    %c256_i32 = arith.constant 256 : i32
    %4 = arith.muli %arg1, %c256_i32 : i32
    %5 = tpu.assume_multiple %4, 128 : i32
    %c0_2 = arith.constant 0 : index
    %6 = arith.index_cast %5 : i32 to index
    %7 = vector.load %arg3[%c0_2, %6] : memref<8x256xbf16, #tpu.memory_space<vmem>>, vector<8x256xbf16>
    %c0_3 = arith.constant 0 : index
    %c0_4 = arith.constant 0 : index
    %8 = vector.load %arg5[%c0_3, %c0_4] : memref<16x8xf32, #tpu.memory_space<vmem>>, vector<16x8xf32>
    %cst = arith.constant dense<0.000000e+00> : vector<16x8xf32>
    %9 = tpu.matmul %3, %7, %cst {dimension_numbers = #tpu.dot_dimension_numbers<[1], [1], [0], [0], [0, 0, 1, 0], [], []>} : vector<16x256xbf16>, vector<8x256xbf16>, vector<16x8xf32> -> vector<16x8xf32>
    %10 = arith.addf %8, %9 : vector<16x8xf32>
    %c0_5 = arith.constant 0 : index
    %c0_6 = arith.constant 0 : index
    %11 = vector.load %arg5[%c0_5, %c0_6] : memref<16x8xf32, #tpu.memory_space<vmem>>, vector<16x8xf32>
    tpu.vector_store %arg5[%c0_5, %c0_6], %10 {strides = array<i32>} : memref<16x8xf32, #tpu.memory_space<vmem>>, vector<16x8xf32>,
    %c0_i32_7 = arith.constant 0 : i32
    %12 = arith.cmpi eq, %arg1, %c0_i32_7 : i32
    %13 = arith.extui %12 : i1 to i32
    %c0_i32_8 = arith.constant 0 : i32
    %14 = arith.cmpi ne, %13, %c0_i32_8 : i32
    scf.if %14 {
      %c0_9 = arith.constant 0 : index
      %c0_10 = arith.constant 0 : index
      %15 = vector.load %arg5[%c0_9, %c0_10] : memref<16x8xf32, #tpu.memory_space<vmem>>, vector<16x1xf32>
      %16 = arith.truncf %15 : vector<16x1xf32> to vector<16x1xbf16>
      %c0_11 = arith.constant 0 : index
      %c0_12 = arith.constant 0 : index
      %17 = vector.load %arg4[%c0_11, %c0_12] : memref<16x1xbf16, #tpu.memory_space<vmem>>, vector<16x1xbf16>
      tpu.vector_store %arg4[%c0_11, %c0_12], %16 {strides = array<i32>} : memref<16x1xbf16, #tpu.memory_space<vmem>>, vector<16x1xbf16>,
    } else {
    }
    return
  }
  func.func @transform_0(%arg0: i32, %arg1: i32) -> (i32, i32) {
    %c0_i32 = arith.constant 0 : i32
    return %arg0, %arg1 : i32, i32
  }
  func.func @transform_1(%arg0: i32, %arg1: i32) -> (i32, i32) {
    %c0_i32 = arith.constant 0 : i32
    %c0_i32_0 = arith.constant 0 : i32
    %c0_i32_1 = arith.constant 0 : i32
    return %c0_i32, %c0_i32_0 : i32, i32
  }
  func.func @transform_2(%arg0: i32, %arg1: i32) -> (i32, i32) {
    %c0_i32 = arith.constant 0 : i32
    %c0_i32_0 = arith.constant 0 : i32
    return %arg0, %c0_i32 : i32, i32
  }
}

</mosaic_0001>

<llo_original>
// kernel: tpu_custom_call.1
$region0: #{tpu_custom_call.1}
  #allocation0 [shape = 'u32[]', space=smem, size = 0x4, offset = 0x4, fixed_abs, tag = 'smem constant byte address 0x4 - core index']
  #allocation1 [shape = 'u32[72,128]{1,0:T(1,128)}', space=vmem, size = 0x9000, scoped, tag = 'internal scratch']
  #allocation2 [shape = 'f32[16,8]{1,0:T(8,128)}', space=vmem, size = 0x2000, scoped, tag = 'scratch operand']
  %s0 = inlined_call_operand.hbm [shape: bf16[16,256], index: 0, kind: input, shape index: {}]
  %s1 = inlined_call_operand.hbm [shape: bf16[8,256], index: 1, kind: input, shape index: {}]
  %s2 = inlined_call_operand.vmem [shape: bf16[16,1], index: 2, kind: output, shape index: {}]
  %s3 = sld [smem:[#allocation0]]
  $region34: #{tpu_custom_call.1} parent=0
    _
  %s5 = ssub.s32 1, %s3
  %s6 = scalar_select 0, %s5, %s3
  $region1: #{tpu_custom_call.1} parent=0
    #allocation3 [shape = 'u8[8192]{0}', space=vmem, size = 0x2000, scoped, tag = 'input window, operand 0, single buffered']
    #allocation4 [shape = 's32[1]{0}', space=sflag, size = 0x4, scoped, tag = 'scoped memory for tpu_custom_call.1']
    #allocation5 [shape = 'u8[4096]{0}', space=vmem, size = 0x1000, scoped, tag = 'input window, operand 1, single buffered']
    #allocation6 [shape = 's32[1]{0}', space=sflag, size = 0x4, scoped, tag = 'scoped memory for tpu_custom_call.1']
    %7 = vsyncpa [#allocation4], 0
    %8 = vsyncpa [#allocation6], 0
    // Predicated region
    $region2: #{tpu_custom_call.1} parent=1 // pred_check
      _
    $region3: #{tpu_custom_call.1} parent=1 // pred_check_branch
      %10 = sbr.rel (0) target = $region5
    $region4: #{tpu_custom_call.1} parent=1 // pred_region
      %12 = vsyncadd [#allocation4], 0
      %s13 = sshll.u32 %s0, 4
      %s14 = int_to_ptr.hbm [resolvable:$true] %s13
      %s15 = sshll.u32 [#allocation3], 4
      %s16 = int_to_ptr.vmem [resolvable:$true] %s15
      %21 = dma.hbm_to_vmem [thread:$0]  %s14, 256, %s16, [#allocation4], 128, 128, 8
    $region5: #{tpu_custom_call.1} parent=1 // pred_fallthru
      _
    // Predicated region
    $region6: #{tpu_custom_call.1} parent=1 // pred_check
      _
    $region7: #{tpu_custom_call.1} parent=1 // pred_check_branch
      %23 = sbr.rel (0) target = $region9
    $region8: #{tpu_custom_call.1} parent=1 // pred_region
      %25 = vsyncadd [#allocation6], 0
      %s27 = sshll.u32 %s1, 4
      %s28 = int_to_ptr.hbm [resolvable:$true] %s27
      %s29 = sshll.u32 [#allocation5], 4
      %s30 = int_to_ptr.vmem [resolvable:$true] %s29
      %32 = dma.hbm_to_vmem [thread:$0]  %s28, 128, %s30, [#allocation6]
    $region9: #{tpu_custom_call.1} parent=1 // pred_fallthru
      _
    // Predicated region
    $region10: #{tpu_custom_call.1} parent=1 // pred_check
      _
    $region11: #{tpu_custom_call.1} parent=1 // pred_check_branch
      %34 = sbr.rel (0) target = $region13
    $region12: #{tpu_custom_call.1} parent=1 // pred_region
      %36 = dma.done [#allocation4], 256
    $region13: #{tpu_custom_call.1} parent=1 // pred_fallthru
      _
    // Predicated region
    $region14: #{tpu_custom_call.1} parent=1 // pred_check
      _
    $region15: #{tpu_custom_call.1} parent=1 // pred_check_branch
      %38 = sbr.rel (0) target = $region17
    $region16: #{tpu_custom_call.1} parent=1 // pred_region
      %40 = dma.done [#allocation6], 128
    $region17: #{tpu_custom_call.1} parent=1 // pred_fallthru
      _
    %p42 = scmp.eq.s32.totalorder 0, 0
    // Predicated region
    $region18: #{tpu_custom_call.1} parent=1 // pred_check
      %p43 = pneg %p42
    $region19: #{tpu_custom_call.1} parent=1 // pred_check_branch
      %45 = sbr.rel (%p43) target = $region21
    $region20: #{tpu_custom_call.1} parent=1 // pred_region
      %vm46 = vcmask 64512
      %47 = vst.msk [vmem:[#allocation2] sm:$0xff] %vm46, 0.0
      %48 = vst.msk [vmem:[#allocation2 + $0x8] sm:$0xff] %vm46, 0.0
    $region21: #{tpu_custom_call.1} parent=1 // pred_fallthru
      _
    %v49 = vld [vmem:[#allocation3] sm:$0xff]
    %v50 = vld [vmem:[#allocation3 + $0x8] sm:$0xff]
    %s51 = smul.u32 0, 256
    %s52 = sshra.s32 %s51, 7
    %s53 = sand.u32 %s51, 127
    %s54 = smul.addr %s52, 4
    %s55 = scalar_lea.vmem [#allocation5], %s54
    %v56 = vld [vmem:[%s55] sm:$0xff]
    %v57 = vld [vmem:[#allocation2] sm:$0xff]
    %v58 = vld [vmem:[#allocation2 + $0x8] sm:$0xff]
    %v61 = vunpack.c.l.b16 %v49
    %v62 = vunpack.c.h.b16 %v49
    %v63 = vunpack.c.l.b16 %v50
    %v64 = vunpack.c.h.b16 %v50
    %v65 = vpack.c.b16 %v63, %v61
    %v66 = vpack.c.b16 %v64, %v62
    %v70 = vunpack.c.l.b16 %v56
    %v71 = vunpack.c.h.b16 %v56
    %v72 = vpack.c.b16 %v70, %v70
    %v73 = vpack.c.b16 %v71, %v71
    %76 = vmatpush.bf16.xpose.msra.mxu0 0
    %77 = vmatpush.bf16.xpose.msra.mxu0 0
    %78 = vmatpush.bf16.xpose.msra.mxu0 0
    %79 = vmatpush.bf16.xpose.msra.mxu0 0
    %80 = vmatpush.bf16.xpose.msra.mxu0 0
    %81 = vmatpush.bf16.xpose.msra.mxu0 0
    %82 = vmatpush.bf16.xpose.msra.mxu0 0
    %83 = vmatpush.bf16.xpose.msra.mxu0 %v72
    %84 = vmatmul.bf16.gmra.mxu0 %v65
    %v85 = vpop.f32.mrf.mxu0
    %v86 = vadd.f32 0.0, %v85
    %v87 = vpop.f32.mrf.mxu0
    %v88 = vadd.f32 0.0, %v87
    %89 = vdwg.mxu0
    %90 = vmatpush.bf16.xpose.msra.mxu0 0
    %91 = vmatpush.bf16.xpose.msra.mxu0 0
    %92 = vmatpush.bf16.xpose.msra.mxu0 0
    %93 = vmatpush.bf16.xpose.msra.mxu0 0
    %94 = vmatpush.bf16.xpose.msra.mxu0 0
    %95 = vmatpush.bf16.xpose.msra.mxu0 0
    %96 = vmatpush.bf16.xpose.msra.mxu0 0
    %97 = vmatpush.bf16.xpose.msra.mxu0 %v73
    %98 = vmatmul.bf16.gmra.mxu0 %v66
    %v99 = vpop.f32.mrf.mxu0
    %v100 = vadd.f32 %v86, %v99
    %v101 = vpop.f32.mrf.mxu0
    %v102 = vadd.f32 %v88, %v101
    %103 = vdwg.mxu0
    %v104 = vadd.f32 %v57, %v100
    %v105 = vadd.f32 %v58, %v102
    %vm106 = vcmask 64512
    %107 = vst.msk [vmem:[#allocation2] sm:$0xff] %vm106, %v104
    %108 = vst.msk [vmem:[#allocation2 + $0x8] sm:$0xff] %vm106, %v105
    // Predicated region
    $region22: #{tpu_custom_call.1} parent=1 // pred_check
      %p109 = pneg %p42
    $region23: #{tpu_custom_call.1} parent=1 // pred_check_branch
      %111 = sbr.rel (%p109) target = $region25
    $region24: #{tpu_custom_call.1} parent=1 // pred_region
      %v112 = vld [vmem:[#allocation2] sm:$0xff]
      %v113 = vld [vmem:[#allocation2 + $0x8] sm:$0xff]
      %v114 = vpack.c.bf16 %v112, %v112
      %v115 = vpack.c.bf16 %v113, %v113
      %vm116 = vcmask 3072
      %117 = vst.msk [vmem:[%s2] sm:$0xf] %vm116, %v114
      %118 = vst.msk [vmem:[%s2 + $0x4] sm:$0xf] %vm116, %v115
    $region25: #{tpu_custom_call.1} parent=1 // pred_fallthru
      _
    // Predicated region
    $region26: #{tpu_custom_call.1} parent=1 // pred_check
      _
    $region27: #{tpu_custom_call.1} parent=1 // pred_check_branch
      %120 = sbr.rel (0) target = $region29
    $region28: #{tpu_custom_call.1} parent=1 // pred_region
      _
    $region29: #{tpu_custom_call.1} parent=1 // pred_fallthru
      _
    // Predicated region
    $region30: #{tpu_custom_call.1} parent=1 // pred_check
      _
    $region31: #{tpu_custom_call.1} parent=1 // pred_check_branch
      %122 = sbr.rel (0) target = $region33
    $region32: #{tpu_custom_call.1} parent=1 // pred_region
      _
    $region33: #{tpu_custom_call.1} parent=1 // pred_fallthru
      _
    %123 = vsyncpa [#allocation4], 1
    %124 = vsyncpa [#allocation6], 1

</llo_original>
